<compile_context>
chip_gen: v6e
topology: v6e:2x2x1
jax: 0.10.0
libtpu: 0.0.40
codegen_flags: <defaults>
</compile_context>

<pallas_src>
import jax
import jax.numpy as jnp
from jax import lax
from jax.experimental import pallas as pl
from jax.experimental.pallas import tpu as pltpu

INPUT_SIZE = 4

_SELU_ALPHA = 1.6732632423543772848170429916717
_SELU_SCALE = 1.0507009873554804934193349852946


def _selu(x):
    # F.selu: scale * (max(0,x) + min(0, alpha*(exp(x)-1)))  -- reference only.
    return _SELU_SCALE * jnp.where(x > 0, x, _SELU_ALPHA * (jnp.exp(x) - 1.0))


def _selu_unscaled(z):
    # g(z) with F.selu(z) == _SELU_SCALE * g(z); the scale is folded into the
    # downstream weights in the wrapper (one fewer VPU multiply per element).
    return jnp.where(z > 0, z, _SELU_ALPHA * jnp.exp(z) - _SELU_ALPHA)


def _decoder_kernel(x_ref,             # (bt, code_size)  row-major batch tile
                    w12_ref, b12_ref,  # (32, code_size), (32, 1)  fused L1+L2
                    w3_ref, b3_ref,    # (16, 32), (16, 1)  (SELU scale in w3)
                    w4_ref, b4_ref,    # (4, 16),  (4, 1)   (SELU scale in w4)
                    o_ref):            # (4, bt)   batch on the 128-lane axis
    x = x_ref[...]
    # Fused layers 1+2: contract on x's LAST axis -> lane-dense (32, bt) result,
    # no wrapper-side transpose of the input required.
    z = lax.dot_general(w12_ref[...], x, (((1,), (1,)), ((), ())),
                        preferred_element_type=jnp.float32) + b12_ref[...]
    h = _selu_unscaled(z)
    # Layer 3: Linear(32 -> 16) + SELU (scale pre-folded into w3).
    z = jnp.dot(w3_ref[...], h, preferred_element_type=jnp.float32) + b3_ref[...]
    h = _selu_unscaled(z)
    # Layer 4: Linear(16 -> 4), no activation (previous SELU's scale is in w4).
    o_ref[...] = (jnp.dot(w4_ref[...], h, preferred_element_type=jnp.float32)
                  + b4_ref[...]).astype(o_ref.dtype)


def decoder_forward(code, params, *, max_batch_tile=8192, transpose_output=True):
    """code: (B, code_size) f32.  Returns (B, 4) (or (4, B) if transpose_output=False)."""
    B, code_size = code.shape

    # ---- wrapper-side param prep (tiny, O(features^2), no per-sample work) ---
    # Fold the activation-free first layer into the second one.
    w12 = params["w1"] @ params["w2"]                    # (code_size, 32)
    b12 = params["b1"] @ params["w2"] + params["b2"]     # (32,)
    # Transposed (features, batch) compute layout; SELU scale folded into the
    # *next* layer's weights (biases stay unscaled).
    w12_t = w12.T                                        # (32, code_size)
    w3_t = (_SELU_SCALE * params["w3"]).T                # (16, 32)
    w4_t = (_SELU_SCALE * params["w4"]).T                # (4, 16)
    b12_c = b12.reshape(-1, 1)                           # (32, 1)
    b3_c = params["b3"].reshape(-1, 1)                   # (16, 1)
    b4_c = params["b4"].reshape(-1, 1)                   # (4, 1)
    out_features = w4_t.shape[0]                         # = INPUT_SIZE

    # ---- batch tiling --------------------------------------------------------
    # Big tiles amortize the ~0.35us/step pipeline overhead (this kernel is
    # overhead-bound at small tiles, not bandwidth-bound).  No explicit padding:
    # Pallas pads the ragged final block on read and masks it on write.
    LANE = 128
    bt = min(max_batch_tile, pl.cdiv(B, LANE) * LANE)
    bt = max(LANE, (bt // LANE) * LANE)
    grid = (pl.cdiv(B, bt),)

    def resident(shape):
        # Constant block index -> stays resident in VMEM, not re-DMA'd per step.
        return pl.BlockSpec(shape, lambda i: (0, 0))

    out = pl.pallas_call(
        _decoder_kernel,
        out_shape=jax.ShapeDtypeStruct((out_features, B), jnp.float32),
        grid=grid,
        in_specs=[
            pl.BlockSpec((bt, code_size), lambda i: (i, 0)),   # row-major batch tile
            resident(w12_t.shape), resident(b12_c.shape),
            resident(w3_t.shape), resident(b3_c.shape),
            resident(w4_t.shape), resident(b4_c.shape),
        ],
        out_specs=pl.BlockSpec((out_features, bt), lambda i: (0, i)),
        compiler_params=pltpu.CompilerParams(
            dimension_semantics=("parallel",)),                # megacore on v7x
    )(code, w12_t, b12_c, w3_t, b3_c, w4_t, b4_c)

    # Kernel emits lane-dense (4, B).  Consumers that can accept that layout
    # should pass transpose_output=False and skip this small XLA relayout.
    return out.T if transpose_output else out


def init_params(key, code_size):
    """Deterministic init matching nn.Linear shapes (weights stored as (in, out))."""
    dims = [(code_size, INPUT_SIZE * 16),        # dec_linear_1: code -> 64
            (INPUT_SIZE * 16, INPUT_SIZE * 8),   # dec_linear_2: 64 -> 32
            (INPUT_SIZE * 8, INPUT_SIZE * 4),    # dec_linear_3: 32 -> 16
            (INPUT_SIZE * 4, INPUT_SIZE)]        # dec_linear_4: 16 -> 4
    params = {}
    for i, (fan_in, fan_out) in enumerate(dims, start=1):
        key, kw, kb = jax.random.split(key, 3)
        bound = 1.0 / jnp.sqrt(jnp.float32(fan_in))
        params[f"w{i}"] = jax.random.uniform(kw, (fan_in, fan_out), jnp.float32,
                                             minval=-bound, maxval=bound)
        params[f"b{i}"] = jax.random.uniform(kb, (fan_out,), jnp.float32,
                                             minval=-bound, maxval=bound)
    return params


def reference_forward(code, params):
    """Pure-JAX reference mirroring the PyTorch Decoder forward."""
    h = code @ params["w1"] + params["b1"]
    h = _selu(h @ params["w2"] + params["b2"])
    h = _selu(h @ params["w3"] + params["b3"])
    return h @ params["w4"] + params["b4"]


if __name__ == "__main__":
    code_size = 8
    batch = 8

    key = jax.random.PRNGKey(0)
    key, kx, kx2 = jax.random.split(key, 3)
    params = init_params(key, code_size)

    # Small batch (single ragged block, B < 128 lanes).
    code = jax.random.normal(kx, (batch, code_size), jnp.float32)
    out = jax.block_until_ready(decoder_forward(code, params))
    ref = reference_forward(code, params)
    assert out.shape == (batch, INPUT_SIZE)
    assert jnp.allclose(out, ref, atol=2e-4, rtol=2e-4), \
        float(jnp.max(jnp.abs(out - ref)))

    # Larger, non-multiple-of-128 batch: multi-step grid + ragged final block.
    big_batch = 300
    code_big = jax.random.normal(kx2, (big_batch, code_size), jnp.float32)
    out_big = jax.block_until_ready(
        decoder_forward(code_big, params, max_batch_tile=128))
    ref_big = reference_forward(code_big, params)
    assert out_big.shape == (big_batch, INPUT_SIZE)
    assert jnp.allclose(out_big, ref_big, atol=2e-4, rtol=2e-4), \
        float(jnp.max(jnp.abs(out_big - ref_big)))

    print("KERNEL_OK")
</pallas_src>

<mosaic_0001>
module attributes {stable_mosaic.version = 11 : i64} {
  func.func @_decoder_kernel(%arg0: i32, %arg1: memref<128x8xf32, #tpu.memory_space<vmem>>, %arg2: memref<32x8xf32, #tpu.memory_space<vmem>>, %arg3: memref<32x1xf32, #tpu.memory_space<vmem>>, %arg4: memref<16x32xf32, #tpu.memory_space<vmem>>, %arg5: memref<16x1xf32, #tpu.memory_space<vmem>>, %arg6: memref<4x16xf32, #tpu.memory_space<vmem>>, %arg7: memref<4x1xf32, #tpu.memory_space<vmem>>, %arg8: memref<4x128xf32, #tpu.memory_space<vmem>>) attributes {dimension_semantics = [#tpu.dimension_semantics<parallel>], iteration_bounds = array<i64: 1>, scalar_prefetch = 0 : i64, scratch_operands = 0 : i64, tpu.core_type = #tpu.core_type<tc>, window_params = [{transform_indices = @transform_0, window_bounds = array<i64: 128, 8>}, {pipeline_mode = #tpu.pipeline_mode<synchronous>, transform_indices = @transform_1, window_bounds = array<i64: 32, 8>}, {pipeline_mode = #tpu.pipeline_mode<synchronous>, transform_indices = @transform_2, window_bounds = array<i64: 32, 1>}, {pipeline_mode = #tpu.pipeline_mode<synchronous>, transform_indices = @transform_3, window_bounds = array<i64: 16, 32>}, {pipeline_mode = #tpu.pipeline_mode<synchronous>, transform_indices = @transform_4, window_bounds = array<i64: 16, 1>}, {pipeline_mode = #tpu.pipeline_mode<synchronous>, transform_indices = @transform_5, window_bounds = array<i64: 4, 16>}, {pipeline_mode = #tpu.pipeline_mode<synchronous>, transform_indices = @transform_6, window_bounds = array<i64: 4, 1>}, {transform_indices = @transform_7, window_bounds = array<i64: 4, 128>}]} {
    %c0 = arith.constant 0 : index
    %c0_0 = arith.constant 0 : index
    %0 = vector.load %arg1[%c0, %c0_0] : memref<128x8xf32, #tpu.memory_space<vmem>>, vector<128x8xf32>
    %c0_1 = arith.constant 0 : index
    %c0_2 = arith.constant 0 : index
    %1 = vector.load %arg2[%c0_1, %c0_2] : memref<32x8xf32, #tpu.memory_space<vmem>>, vector<32x8xf32>
    %cst = arith.constant dense<0.000000e+00> : vector<32x128xf32>
    %2 = tpu.matmul %1, %0, %cst {dimension_numbers = #tpu.dot_dimension_numbers<[1], [1], [0], [0], [0, 0, 1, 0], [], []>} : vector<32x8xf32>, vector<128x8xf32>, vector<32x128xf32> -> vector<32x128xf32>
    %c0_3 = arith.constant 0 : index
    %c0_4 = arith.constant 0 : index
    %3 = vector.load %arg3[%c0_3, %c0_4] : memref<32x1xf32, #tpu.memory_space<vmem>>, vector<32x1xf32>
    %4 = vector.broadcast %3 : vector<32x1xf32> to vector<32x128xf32>
    %5 = arith.addf %2, %4 : vector<32x128xf32>
    %cst_5 = arith.constant 0.000000e+00 : f32
    %6 = vector.broadcast %cst_5 : f32 to vector<32x128xf32>
    %7 = arith.cmpf ogt, %5, %6 : vector<32x128xf32>
    %8 = math.exp %5 : vector<32x128xf32>
    %cst_6 = arith.constant 1.67326319 : f32
    %9 = vector.broadcast %cst_6 : f32 to vector<32x128xf32>
    %10 = arith.mulf %9, %8 : vector<32x128xf32>
    %cst_7 = arith.constant 1.67326319 : f32
    %11 = vector.broadcast %cst_7 : f32 to vector<32x128xf32>
    %12 = arith.subf %10, %11 : vector<32x128xf32>
    %13 = arith.select %7, %5, %12 : vector<32x128xi1>, vector<32x128xf32>
    %c0_8 = arith.constant 0 : index
    %c0_9 = arith.constant 0 : index
    %14 = vector.load %arg4[%c0_8, %c0_9] : memref<16x32xf32, #tpu.memory_space<vmem>>, vector<16x32xf32>
    %cst_10 = arith.constant dense<0.000000e+00> : vector<16x128xf32>
    %15 = tpu.matmul %14, %13, %cst_10 {dimension_numbers = #tpu.dot_dimension_numbers<[1], [0], [0], [1], [0, 0, 1, 1], [], []>} : vector<16x32xf32>, vector<32x128xf32>, vector<16x128xf32> -> vector<16x128xf32>
    %c0_11 = arith.constant 0 : index
    %c0_12 = arith.constant 0 : index
    %16 = vector.load %arg5[%c0_11, %c0_12] : memref<16x1xf32, #tpu.memory_space<vmem>>, vector<16x1xf32>
    %17 = vector.broadcast %16 : vector<16x1xf32> to vector<16x128xf32>
    %18 = arith.addf %15, %17 : vector<16x128xf32>
    %cst_13 = arith.constant 0.000000e+00 : f32
    %19 = vector.broadcast %cst_13 : f32 to vector<16x128xf32>
    %20 = arith.cmpf ogt, %18, %19 : vector<16x128xf32>
    %21 = math.exp %18 : vector<16x128xf32>
    %cst_14 = arith.constant 1.67326319 : f32
    %22 = vector.broadcast %cst_14 : f32 to vector<16x128xf32>
    %23 = arith.mulf %22, %21 : vector<16x128xf32>
    %cst_15 = arith.constant 1.67326319 : f32
    %24 = vector.broadcast %cst_15 : f32 to vector<16x128xf32>
    %25 = arith.subf %23, %24 : vector<16x128xf32>
    %26 = arith.select %20, %18, %25 : vector<16x128xi1>, vector<16x128xf32>
    %c0_16 = arith.constant 0 : index
    %c0_17 = arith.constant 0 : index
    %27 = vector.load %arg6[%c0_16, %c0_17] : memref<4x16xf32, #tpu.memory_space<vmem>>, vector<4x16xf32>
    %cst_18 = arith.constant dense<0.000000e+00> : vector<4x128xf32>
    %28 = tpu.matmul %27, %26, %cst_18 {dimension_numbers = #tpu.dot_dimension_numbers<[1], [0], [0], [1], [0, 0, 1, 1], [], []>} : vector<4x16xf32>, vector<16x128xf32>, vector<4x128xf32> -> vector<4x128xf32>
    %c0_19 = arith.constant 0 : index
    %c0_20 = arith.constant 0 : index
    %29 = vector.load %arg7[%c0_19, %c0_20] : memref<4x1xf32, #tpu.memory_space<vmem>>, vector<4x1xf32>
    %30 = vector.broadcast %29 : vector<4x1xf32> to vector<4x128xf32>
    %31 = arith.addf %28, %30 : vector<4x128xf32>
    %c0_21 = arith.constant 0 : index
    %c0_22 = arith.constant 0 : index
    %32 = vector.load %arg8[%c0_21, %c0_22] : memref<4x128xf32, #tpu.memory_space<vmem>>, vector<4x128xf32>
    tpu.vector_store %arg8[%c0_21, %c0_22], %31 {strides = array<i32>} : memref<4x128xf32, #tpu.memory_space<vmem>>, vector<4x128xf32>,
    return
  }
  func.func @transform_0(%arg0: i32) -> (i32, i32) {
    %c0_i32 = arith.constant 0 : i32
    %c0_i32_0 = arith.constant 0 : i32
    return %arg0, %c0_i32 : i32, i32
  }
  func.func @transform_1(%arg0: i32) -> (i32, i32) {
    %c0_i32 = arith.constant 0 : i32
    %c0_i32_0 = arith.constant 0 : i32
    %c0_i32_1 = arith.constant 0 : i32
    return %c0_i32, %c0_i32_0 : i32, i32
  }
  func.func @transform_2(%arg0: i32) -> (i32, i32) {
    %c0_i32 = arith.constant 0 : i32
    %c0_i32_0 = arith.constant 0 : i32
    %c0_i32_1 = arith.constant 0 : i32
    return %c0_i32, %c0_i32_0 : i32, i32
  }
  func.func @transform_3(%arg0: i32) -> (i32, i32) {
    %c0_i32 = arith.constant 0 : i32
    %c0_i32_0 = arith.constant 0 : i32
    %c0_i32_1 = arith.constant 0 : i32
    return %c0_i32, %c0_i32_0 : i32, i32
  }
  func.func @transform_4(%arg0: i32) -> (i32, i32) {
    %c0_i32 = arith.constant 0 : i32
    %c0_i32_0 = arith.constant 0 : i32
    %c0_i32_1 = arith.constant 0 : i32
    return %c0_i32, %c0_i32_0 : i32, i32
  }
  func.func @transform_5(%arg0: i32) -> (i32, i32) {
    %c0_i32 = arith.constant 0 : i32
    %c0_i32_0 = arith.constant 0 : i32
    %c0_i32_1 = arith.constant 0 : i32
    return %c0_i32, %c0_i32_0 : i32, i32
  }
  func.func @transform_6(%arg0: i32) -> (i32, i32) {
    %c0_i32 = arith.constant 0 : i32
    %c0_i32_0 = arith.constant 0 : i32
    %c0_i32_1 = arith.constant 0 : i32
    return %c0_i32, %c0_i32_0 : i32, i32
  }
  func.func @transform_7(%arg0: i32) -> (i32, i32) {
    %c0_i32 = arith.constant 0 : i32
    %c0_i32_0 = arith.constant 0 : i32
    return %c0_i32, %arg0 : i32, i32
  }
}

</mosaic_0001>

<llo_original>
// kernel: tpu_custom_call.1
$region0: #{tpu_custom_call.1}
  #allocation0 [shape = 'u32[]', space=smem, size = 0x4, offset = 0x4, fixed_abs, tag = 'smem constant byte address 0x4 - core index']
  #allocation1 [shape = 'u32[144,128]{1,0:T(1,128)}', space=vmem, size = 0x12000, scoped, tag = 'internal scratch']
  %s0 = inlined_call_operand.vmem [shape: f32[8,8], index: 0, kind: input, shape index: {}]
  %s1 = inlined_call_operand.vmem [shape: f32[32,8], index: 1, kind: input, shape index: {}]
  %s2 = inlined_call_operand.vmem [shape: f32[32,1], index: 2, kind: input, shape index: {}]
  %s3 = inlined_call_operand.vmem [shape: f32[16,32], index: 3, kind: input, shape index: {}]
  %s4 = inlined_call_operand.vmem [shape: f32[16,1], index: 4, kind: input, shape index: {}]
  %s5 = inlined_call_operand.vmem [shape: f32[4,16], index: 5, kind: input, shape index: {}]
  %s6 = inlined_call_operand.vmem [shape: f32[4,1], index: 6, kind: input, shape index: {}]
  %s7 = inlined_call_operand.hbm [shape: f32[4,8], index: 7, kind: output, shape index: {}]
  %s8 = sld [smem:[#allocation0]]
  $region38: #{tpu_custom_call.1} parent=0
    _
  %s10 = ssub.s32 1, %s8
  %s11 = scalar_select 0, %s10, %s8
  $region1: #{tpu_custom_call.1} parent=0
    #allocation2 [shape = 'u8[2048]{0}', space=vmem, size = 0x800, scoped, tag = 'output window, operand 0, single buffered']
    #allocation3 [shape = 's32[1]{0}', space=sflag, size = 0x4, scoped, tag = 'scoped memory for tpu_custom_call.1']
    %12 = vsyncpa [#allocation3], 0
    // Predicated region
    $region2: #{tpu_custom_call.1} parent=1 // pred_check
      _
    $region3: #{tpu_custom_call.1} parent=1 // pred_check_branch
      %14 = sbr.rel (0) target = $region5
    $region4: #{tpu_custom_call.1} parent=1 // pred_region
      _
    $region5: #{tpu_custom_call.1} parent=1 // pred_fallthru
      _
    // Predicated region
    $region6: #{tpu_custom_call.1} parent=1 // pred_check
      _
    $region7: #{tpu_custom_call.1} parent=1 // pred_check_branch
      %16 = sbr.rel (0) target = $region9
    $region8: #{tpu_custom_call.1} parent=1 // pred_region
      _
    $region9: #{tpu_custom_call.1} parent=1 // pred_fallthru
      _
    // Predicated region
    $region10: #{tpu_custom_call.1} parent=1 // pred_check
      _
    $region11: #{tpu_custom_call.1} parent=1 // pred_check_branch
      %18 = sbr.rel (0) target = $region13
    $region12: #{tpu_custom_call.1} parent=1 // pred_region
      _
    $region13: #{tpu_custom_call.1} parent=1 // pred_fallthru
      _
    // Predicated region
    $region14: #{tpu_custom_call.1} parent=1 // pred_check
      _
    $region15: #{tpu_custom_call.1} parent=1 // pred_check_branch
      %20 = sbr.rel (0) target = $region17
    $region16: #{tpu_custom_call.1} parent=1 // pred_region
      _
    $region17: #{tpu_custom_call.1} parent=1 // pred_fallthru
      _
    // Predicated region
    $region18: #{tpu_custom_call.1} parent=1 // pred_check
      _
    $region19: #{tpu_custom_call.1} parent=1 // pred_check_branch
      %22 = sbr.rel (0) target = $region21
    $region20: #{tpu_custom_call.1} parent=1 // pred_region
      _
    $region21: #{tpu_custom_call.1} parent=1 // pred_fallthru
      _
    // Predicated region
    $region22: #{tpu_custom_call.1} parent=1 // pred_check
      _
    $region23: #{tpu_custom_call.1} parent=1 // pred_check_branch
      %24 = sbr.rel (0) target = $region25
    $region24: #{tpu_custom_call.1} parent=1 // pred_region
      _
    $region25: #{tpu_custom_call.1} parent=1 // pred_fallthru
      _
    // Predicated region
    $region26: #{tpu_custom_call.1} parent=1 // pred_check
      _
    $region27: #{tpu_custom_call.1} parent=1 // pred_check_branch
      %26 = sbr.rel (0) target = $region29
    $region28: #{tpu_custom_call.1} parent=1 // pred_region
      _
    $region29: #{tpu_custom_call.1} parent=1 // pred_fallthru
      _
    %v27 = vld [vmem:[%s0] sm:$0xff]
    %v28 = vld [vmem:[%s0 + $0x8] sm:$0xff]
    %v29 = vld [vmem:[%s0 + $0x10] sm:$0xff]
    %v30 = vld [vmem:[%s0 + $0x18] sm:$0xff]
    %v31 = vld [vmem:[%s0 + $0x20] sm:$0xff]
    %v32 = vld [vmem:[%s0 + $0x28] sm:$0xff]
    %v33 = vld [vmem:[%s0 + $0x30] sm:$0xff]
    %v34 = vld [vmem:[%s0 + $0x38] sm:$0xff]
    %v35 = vld [vmem:[%s0 + $0x40] sm:$0xff]
    %v36 = vld [vmem:[%s0 + $0x48] sm:$0xff]
    %v37 = vld [vmem:[%s0 + $0x50] sm:$0xff]
    %v38 = vld [vmem:[%s0 + $0x58] sm:$0xff]
    %v39 = vld [vmem:[%s0 + $0x60] sm:$0xff]
    %v40 = vld [vmem:[%s0 + $0x68] sm:$0xff]
    %v41 = vld [vmem:[%s0 + $0x70] sm:$0xff]
    %v42 = vld [vmem:[%s0 + $0x78] sm:$0xff]
    %v43 = vld [vmem:[%s1] sm:$0xff]
    %v44 = vld [vmem:[%s1 + $0x8] sm:$0xff]
    %v45 = vld [vmem:[%s1 + $0x10] sm:$0xff]
    %v46 = vld [vmem:[%s1 + $0x18] sm:$0xff]
    %v47 = vld [vmem:[%s2] sm:$0xff]
    %v48 = vld [vmem:[%s2 + $0x8] sm:$0xff]
    %v49 = vld [vmem:[%s2 + $0x10] sm:$0xff]
    %v50 = vld [vmem:[%s2 + $0x18] sm:$0xff]
    %52 = vset.pattern.permute.xlu0 0
    %53 = vperm.xlu0 %52, %v47
    %v54 = vpop.permute.xlu0 %53
    %57 = vset.pattern.permute.xlu0 0
    %58 = vperm.xlu0 %57, %v48
    %v59 = vpop.permute.xlu0 %58
    %62 = vset.pattern.permute.xlu0 0
    %63 = vperm.xlu0 %62, %v49
    %v64 = vpop.permute.xlu0 %63
    %67 = vset.pattern.permute.xlu0 0
    %68 = vperm.xlu0 %67, %v50
    %v69 = vpop.permute.xlu0 %68
    %vm71 = vcmask 64512
    %v73 = vsel %vm71, %v43, 0
    %v76 = vsel %vm71, %v44, 0
    %v79 = vsel %vm71, %v45, 0
    %v82 = vsel %vm71, %v46, 0
    %v85 = vsel %vm71, %v27, 0
    %v88 = vsel %vm71, %v28, 0
    %v91 = vsel %vm71, %v29, 0
    %v94 = vsel %vm71, %v30, 0
    %v97 = vsel %vm71, %v31, 0
    %v100 = vsel %vm71, %v32, 0
    %v103 = vsel %vm71, %v33, 0
    %v106 = vsel %vm71, %v34, 0
    %v109 = vsel %vm71, %v35, 0
    %v112 = vsel %vm71, %v36, 0
    %v115 = vsel %vm71, %v37, 0
    %v118 = vsel %vm71, %v38, 0
    %v121 = vsel %vm71, %v39, 0
    %v124 = vsel %vm71, %v40, 0
    %v127 = vsel %vm71, %v41, 0
    %v130 = vsel %vm71, %v42, 0
    %132 = vmatprep.subr.mxu0 0.0
    %133 = vmatpush1.xpose.msra.mxu0 %v130
    %134 = vmatprep.subr.mxu0 0.0
    %135 = vmatpush1.xpose.msra.mxu0 %v127
    %136 = vmatprep.subr.mxu0 0.0
    %137 = vmatpush1.xpose.msra.mxu0 %v124
    %138 = vmatprep.subr.mxu0 0.0
    %139 = vmatpush1.xpose.msra.mxu0 %v121
    %140 = vmatprep.subr.mxu0 0.0
    %141 = vmatpush1.xpose.msra.mxu0 %v118
    %142 = vmatprep.subr.mxu0 0.0
    %143 = vmatpush1.xpose.msra.mxu0 %v115
    %144 = vmatprep.subr.mxu0 0.0
    %145 = vmatpush1.xpose.msra.mxu0 %v112
    %146 = vmatprep.subr.mxu0 0.0
    %147 = vmatpush1.xpose.msra.mxu0 %v109
    %148 = vmatprep.subr.mxu0 0.0
    %149 = vmatpush1.xpose.msra.mxu0 %v106
    %150 = vmatprep.subr.mxu0 0.0
    %151 = vmatpush1.xpose.msra.mxu0 %v103
    %152 = vmatprep.subr.mxu0 0.0
    %153 = vmatpush1.xpose.msra.mxu0 %v100
    %154 = vmatprep.subr.mxu0 0.0
    %155 = vmatpush1.xpose.msra.mxu0 %v97
    %156 = vmatprep.subr.mxu0 0.0
    %157 = vmatpush1.xpose.msra.mxu0 %v94
    %158 = vmatprep.subr.mxu0 0.0
    %159 = vmatpush1.xpose.msra.mxu0 %v91
    %160 = vmatprep.subr.mxu0 0.0
    %161 = vmatpush1.xpose.msra.mxu0 %v88
    %162 = vmatprep.subr.mxu0 0.0
    %163 = vmatpush1.xpose.msra.mxu0 %v85
    %164 = vmatprep.subr.mxu0 0.0
    %165 = vmatpush2.xpose.msra.mxu0 0.0
    %166 = vmatprep.subr.mxu0 0.0
    %167 = vmatpush2.xpose.msra.mxu0 0.0
    %168 = vmatprep.subr.mxu0 0.0
    %169 = vmatpush2.xpose.msra.mxu0 0.0
    %170 = vmatprep.subr.mxu0 0.0
    %171 = vmatpush2.xpose.msra.mxu0 0.0
    %172 = vmatprep.subr.mxu0 0.0
    %173 = vmatpush2.xpose.msra.mxu0 0.0
    %174 = vmatprep.subr.mxu0 0.0
    %175 = vmatpush2.xpose.msra.mxu0 0.0
    %176 = vmatprep.subr.mxu0 0.0
    %177 = vmatpush2.xpose.msra.mxu0 0.0
    %178 = vmatprep.subr.mxu0 0.0
    %179 = vmatpush2.xpose.msra.mxu0 0.0
    %180 = vmatprep.subr.mxu0 0.0
    %181 = vmatpush2.xpose.msra.mxu0 0.0
    %182 = vmatprep.subr.mxu0 0.0
    %183 = vmatpush2.xpose.msra.mxu0 0.0
    %184 = vmatprep.subr.mxu0 0.0
    %185 = vmatpush2.xpose.msra.mxu0 0.0
    %186 = vmatprep.subr.mxu0 0.0
    %187 = vmatpush2.xpose.msra.mxu0 0.0
    %188 = vmatprep.subr.mxu0 0.0
    %189 = vmatpush2.xpose.msra.mxu0 0.0
    %190 = vmatprep.subr.mxu0 0.0
    %191 = vmatpush2.xpose.msra.mxu0 0.0
    %192 = vmatprep.subr.mxu0 0.0
    %193 = vmatpush2.xpose.msra.mxu0 0.0
    %194 = vmatprep.subr.mxu0 0.0
    %195 = vmatpush2.xpose.msra.mxu0 0.0
    %196 = vmatprep.mubr.f32.mxu0 0.0
    %197 = vmatmul.mubr.f32.gmra.mxu0 %v73
    %v198 = vpop.f32.mrf.mxu0
    %v199 = vadd.f32 %v54, %v198
    %v200 = vpop.f32.mrf.mxu0
    %201 = vmatprep.mubr.f32.mxu0 0.0
    %202 = vmatmul.mubr.f32.gmra.mxu0 %v76
    %v203 = vpop.f32.mrf.mxu0
    %v204 = vadd.f32 %v59, %v203
    %v205 = vpop.f32.mrf.mxu0
    %206 = vmatprep.mubr.f32.mxu0 0.0
    %207 = vmatmul.mubr.f32.gmra.mxu0 %v79
    %v208 = vpop.f32.mrf.mxu0
    %v209 = vadd.f32 %v64, %v208
    %v210 = vpop.f32.mrf.mxu0
    %211 = vmatprep.mubr.f32.mxu0 0.0
    %212 = vmatmul.mubr.f32.gmra.mxu0 %v82
    %v213 = vpop.f32.mrf.mxu0
    %v214 = vadd.f32 %v69, %v213
    %v215 = vpop.f32.mrf.mxu0
    %216 = vdwg.mxu0
    %vm217 = vcmp.gt.f32.partialorder %v199, 0.0
    %vm218 = vcmp.gt.f32.partialorder %v204, 0.0
    %vm219 = vcmp.gt.f32.partialorder %v209, 0.0
    %vm220 = vcmp.gt.f32.partialorder %v214, 0.0
    %v221 = vmul.f32 %v199, 1.442695
    %v222 = vpow.pop %v221
    %v223 = vmul.f32 %v204, 1.442695
    %v224 = vpow.pop %v223
    %v225 = vmul.f32 %v209, 1.442695
    %v226 = vpow.pop %v225
    %v227 = vmul.f32 %v214, 1.442695
    %v228 = vpow.pop %v227
    %v229 = vmul.f32 %v222, 1.6732632
    %v230 = vmul.f32 %v224, 1.6732632
    %v231 = vmul.f32 %v226, 1.6732632
    %v232 = vmul.f32 %v228, 1.6732632
    %v233 = vsub.f32 %v229, 1.6732632
    %v234 = vsub.f32 %v230, 1.6732632
    %v235 = vsub.f32 %v231, 1.6732632
    %v236 = vsub.f32 %v232, 1.6732632
    %v237 = vsel %vm217, %v199, %v233
    %v238 = vsel %vm218, %v204, %v234
    %v239 = vsel %vm219, %v209, %v235
    %v240 = vsel %vm220, %v214, %v236
    %v241 = vld [vmem:[%s3] sm:$0xff]
    %v242 = vld [vmem:[%s3 + $0x8] sm:$0xff]
    %v243 = vld [vmem:[%s4] sm:$0xff]
    %v244 = vld [vmem:[%s4 + $0x8] sm:$0xff]
    %246 = vset.pattern.permute.xlu0 0
    %247 = vperm.xlu0 %246, %v243
    %v248 = vpop.permute.xlu0 %247
    %251 = vset.pattern.permute.xlu0 0
    %252 = vperm.xlu0 %251, %v244
    %v253 = vpop.permute.xlu0 %252
    %vm255 = vcmask 261120
    %v257 = vsel %vm255, %v241, 0
    %v260 = vsel %vm255, %v242, 0
    %262 = vmatprep.subr.mxu0 0.0
    %263 = vmatpush1.msra.mxu0 0.0
    %264 = vmatprep.subr.mxu0 0.0
    %265 = vmatpush1.msra.mxu0 0.0
    %266 = vmatprep.subr.mxu0 0.0
    %267 = vmatpush1.msra.mxu0 0.0
    %268 = vmatprep.subr.mxu0 0.0
    %269 = vmatpush1.msra.mxu0 0.0
    %270 = vmatprep.subr.mxu0 0.0
    %271 = vmatpush1.msra.mxu0 0.0
    %272 = vmatprep.subr.mxu0 0.0
    %273 = vmatpush1.msra.mxu0 0.0
    %274 = vmatprep.subr.mxu0 0.0
    %275 = vmatpush1.msra.mxu0 0.0
    %276 = vmatprep.subr.mxu0 0.0
    %277 = vmatpush1.msra.mxu0 0.0
    %278 = vmatprep.subr.mxu0 0.0
    %279 = vmatpush1.msra.mxu0 0.0
    %280 = vmatprep.subr.mxu0 0.0
    %281 = vmatpush1.msra.mxu0 0.0
    %282 = vmatprep.subr.mxu0 0.0
    %283 = vmatpush1.msra.mxu0 0.0
    %284 = vmatprep.subr.mxu0 0.0
    %285 = vmatpush1.msra.mxu0 0.0
    %286 = vmatprep.subr.mxu0 0.0
    %287 = vmatpush1.msra.mxu0 %v240
    %288 = vmatprep.subr.mxu0 0.0
    %289 = vmatpush1.msra.mxu0 %v239
    %290 = vmatprep.subr.mxu0 0.0
    %291 = vmatpush1.msra.mxu0 %v238
    %292 = vmatprep.subr.mxu0 0.0
    %293 = vmatpush1.msra.mxu0 %v237
    %294 = vmatprep.subr.mxu0 0.0
    %295 = vmatpush2.msra.mxu0 0.0
    %296 = vmatprep.subr.mxu0 0.0
    %297 = vmatpush2.msra.mxu0 0.0
    %298 = vmatprep.subr.mxu0 0.0
    %299 = vmatpush2.msra.mxu0 0.0
    %300 = vmatprep.subr.mxu0 0.0
    %301 = vmatpush2.msra.mxu0 0.0
    %302 = vmatprep.subr.mxu0 0.0
    %303 = vmatpush2.msra.mxu0 0.0
    %304 = vmatprep.subr.mxu0 0.0
    %305 = vmatpush2.msra.mxu0 0.0
    %306 = vmatprep.subr.mxu0 0.0
    %307 = vmatpush2.msra.mxu0 0.0
    %308 = vmatprep.subr.mxu0 0.0
    %309 = vmatpush2.msra.mxu0 0.0
    %310 = vmatprep.subr.mxu0 0.0
    %311 = vmatpush2.msra.mxu0 0.0
    %312 = vmatprep.subr.mxu0 0.0
    %313 = vmatpush2.msra.mxu0 0.0
    %314 = vmatprep.subr.mxu0 0.0
    %315 = vmatpush2.msra.mxu0 0.0
    %316 = vmatprep.subr.mxu0 0.0
    %317 = vmatpush2.msra.mxu0 0.0
    %318 = vmatprep.subr.mxu0 0.0
    %319 = vmatpush2.msra.mxu0 0.0
    %320 = vmatprep.subr.mxu0 0.0
    %321 = vmatpush2.msra.mxu0 0.0
    %322 = vmatprep.subr.mxu0 0.0
    %323 = vmatpush2.msra.mxu0 0.0
    %324 = vmatprep.subr.mxu0 0.0
    %325 = vmatpush2.msra.mxu0 0.0
    %326 = vmatprep.mubr.f32.mxu0 0.0
    %327 = vmatmul.mubr.f32.gmra.mxu0 %v257
    %v328 = vpop.f32.mrf.mxu0
    %v329 = vadd.f32 %v248, %v328
    %v330 = vpop.f32.mrf.mxu0
    %331 = vmatprep.mubr.f32.mxu0 0.0
    %332 = vmatmul.mubr.f32.gmra.mxu0 %v260
    %v333 = vpop.f32.mrf.mxu0
    %v334 = vadd.f32 %v253, %v333
    %v335 = vpop.f32.mrf.mxu0
    %336 = vdwg.mxu0
    %vm337 = vcmp.gt.f32.partialorder %v329, 0.0
    %vm338 = vcmp.gt.f32.partialorder %v334, 0.0
    %v339 = vmul.f32 %v329, 1.442695
    %v340 = vpow.pop %v339
    %v341 = vmul.f32 %v334, 1.442695
    %v342 = vpow.pop %v341
    %v343 = vmul.f32 %v340, 1.6732632
    %v344 = vmul.f32 %v342, 1.6732632
    %v345 = vsub.f32 %v343, 1.6732632
    %v346 = vsub.f32 %v344, 1.6732632
    %v347 = vsel %vm337, %v329, %v345
    %v348 = vsel %vm338, %v334, %v346
    %v349 = vld [vmem:[%s5] sm:$0xf]
    %v350 = vld [vmem:[%s6] sm:$0xf]
    %352 = vset.pattern.permute.xlu0 0
    %353 = vperm.xlu0 %352, %v350
    %v354 = vpop.permute.xlu0 %353
    %vm356 = vcmask 130048
    %v358 = vsel %vm356, %v349, 0
    %360 = vmatprep.subr.mxu0 0.0
    %361 = vmatpush1.msra.mxu0 0.0
    %362 = vmatprep.subr.mxu0 0.0
    %363 = vmatpush1.msra.mxu0 0.0
    %364 = vmatprep.subr.mxu0 0.0
    %365 = vmatpush1.msra.mxu0 0.0
    %366 = vmatprep.subr.mxu0 0.0
    %367 = vmatpush1.msra.mxu0 0.0
    %368 = vmatprep.subr.mxu0 0.0
    %369 = vmatpush1.msra.mxu0 0.0
    %370 = vmatprep.subr.mxu0 0.0
    %371 = vmatpush1.msra.mxu0 0.0
    %372 = vmatprep.subr.mxu0 0.0
    %373 = vmatpush1.msra.mxu0 0.0
    %374 = vmatprep.subr.mxu0 0.0
    %375 = vmatpush1.msra.mxu0 0.0
    %376 = vmatprep.subr.mxu0 0.0
    %377 = vmatpush1.msra.mxu0 0.0
    %378 = vmatprep.subr.mxu0 0.0
    %379 = vmatpush1.msra.mxu0 0.0
    %380 = vmatprep.subr.mxu0 0.0
    %381 = vmatpush1.msra.mxu0 0.0
    %382 = vmatprep.subr.mxu0 0.0
    %383 = vmatpush1.msra.mxu0 0.0
    %384 = vmatprep.subr.mxu0 0.0
    %385 = vmatpush1.msra.mxu0 0.0
    %386 = vmatprep.subr.mxu0 0.0
    %387 = vmatpush1.msra.mxu0 0.0
    %388 = vmatprep.subr.mxu0 0.0
    %389 = vmatpush1.msra.mxu0 %v348
    %390 = vmatprep.subr.mxu0 0.0
    %391 = vmatpush1.msra.mxu0 %v347
    %392 = vmatprep.subr.mxu0 0.0
    %393 = vmatpush2.msra.mxu0 0.0
    %394 = vmatprep.subr.mxu0 0.0
    %395 = vmatpush2.msra.mxu0 0.0
    %396 = vmatprep.subr.mxu0 0.0
    %397 = vmatpush2.msra.mxu0 0.0
    %398 = vmatprep.subr.mxu0 0.0
    %399 = vmatpush2.msra.mxu0 0.0
    %400 = vmatprep.subr.mxu0 0.0
    %401 = vmatpush2.msra.mxu0 0.0
    %402 = vmatprep.subr.mxu0 0.0
    %403 = vmatpush2.msra.mxu0 0.0
    %404 = vmatprep.subr.mxu0 0.0
    %405 = vmatpush2.msra.mxu0 0.0
    %406 = vmatprep.subr.mxu0 0.0
    %407 = vmatpush2.msra.mxu0 0.0
    %408 = vmatprep.subr.mxu0 0.0
    %409 = vmatpush2.msra.mxu0 0.0
    %410 = vmatprep.subr.mxu0 0.0
    %411 = vmatpush2.msra.mxu0 0.0
    %412 = vmatprep.subr.mxu0 0.0
    %413 = vmatpush2.msra.mxu0 0.0
    %414 = vmatprep.subr.mxu0 0.0
    %415 = vmatpush2.msra.mxu0 0.0
    %416 = vmatprep.subr.mxu0 0.0
    %417 = vmatpush2.msra.mxu0 0.0
    %418 = vmatprep.subr.mxu0 0.0
    %419 = vmatpush2.msra.mxu0 0.0
    %420 = vmatprep.subr.mxu0 0.0
    %421 = vmatpush2.msra.mxu0 0.0
    %422 = vmatprep.subr.mxu0 0.0
    %423 = vmatpush2.msra.mxu0 0.0
    %424 = vmatprep.mubr.f32.mxu0 0.0
    %425 = vmatmul.mubr.f32.gmra.mxu0 %v358
    %v426 = vpop.f32.mrf.mxu0
    %v427 = vadd.f32 %v354, %v426
    %v428 = vpop.f32.mrf.mxu0
    %429 = vdwg.mxu0
    %430 = vst [vmem:[#allocation2] sm:$0xf] %v427
    // Predicated region
    $region30: #{tpu_custom_call.1} parent=1 // pred_check
      _
    $region31: #{tpu_custom_call.1} parent=1 // pred_check_branch
      %432 = sbr.rel (0) target = $region33
    $region32: #{tpu_custom_call.1} parent=1 // pred_region
      %s434 = ssub.s32 64, 64
      %435 = vsyncadd [#allocation3], %s434
      %s437 = sshll.u32 [#allocation2], 4
      %s438 = int_to_ptr.vmem [resolvable:$true] %s437
      %440 = dma.vmem_to_hbm [thread:$0]  %s438, 64, %s7, [#allocation3]
    $region33: #{tpu_custom_call.1} parent=1 // pred_fallthru
      _
    // Predicated region
    $region34: #{tpu_custom_call.1} parent=1 // pred_check
      _
    $region35: #{tpu_custom_call.1} parent=1 // pred_check_branch
      %442 = sbr.rel (0) target = $region37
    $region36: #{tpu_custom_call.1} parent=1 // pred_region
      %443 = dma.done [#allocation3], 64
    $region37: #{tpu_custom_call.1} parent=1 // pred_fallthru
      _
    %444 = vsyncpa [#allocation3], 1

</llo_original>
